<compile_context>
chip_gen: v6e
topology: v6e:2x2x1
jax: 0.10.0
libtpu: 0.0.40
codegen_flags: <defaults>
</compile_context>

<pallas_src>
import math

import jax
import jax.numpy as jnp
from jax.experimental import pallas as pl
from jax.experimental.pallas import tpu as pltpu

_LANE = 128


def _round_up(a: int, b: int) -> int:
    return ((a + b - 1) // b) * b


def _sinusoid_table(hidden_size: int, max_len: int, dtype=jnp.float32) -> jnp.ndarray:
    """Sinusoidal table, shape (max_len, hidden_size); matches the PyTorch buffer."""
    position = jnp.arange(0, max_len, dtype=jnp.float32)[:, None]            # (L, 1)
    div_term = jnp.exp(
        jnp.arange(0, hidden_size, 2, dtype=jnp.float32)
        * (-math.log(10000.0) / hidden_size)
    )                                                                         # (H/2,)
    angles = position * div_term                                              # (L, H/2)
    pe = jnp.zeros((max_len, hidden_size), dtype=jnp.float32)
    pe = pe.at[:, 0::2].set(jnp.sin(angles))
    pe = pe.at[:, 1::2].set(jnp.cos(angles))
    return pe.astype(dtype)


def init_pe_table(hidden_size: int, max_len: int = 5000, dtype=jnp.float32,
                  batch: int | None = None) -> jnp.ndarray:
    """Build the fixed PE buffer once, in the forward dtype.

    hidden >= 128 (or batch unknown): returns (max_len, hidden); the batch
    broadcast is done in-kernel, so the pe HBM stream is 1/batch of x's.
    hidden < 128 with a known batch: pre-tiles across batch to
    (max_len, batch*hidden) so the forward is a lane-denser flat 2-D add.
    """
    pe = _sinusoid_table(hidden_size, max_len, dtype)
    if hidden_size >= _LANE or batch is None:
        return pe
    return jnp.tile(pe, (1, batch))


# ----------------------------------------------------------------------------
# Kernels
# ----------------------------------------------------------------------------
def _pe_add_bcast_kernel(x_ref, pe_ref, o_ref):
    # x_ref/o_ref: (ts, batch, hidden); pe_ref: (ts, hidden).
    # Batch broadcast done in-register (sublane broadcast) — hidden under the
    # HBM roofline.  Per-tile cast is a no-op when dtypes already match.
    pe = pe_ref[...].astype(x_ref.dtype)
    o_ref[...] = x_ref[...] + pe[:, None, :]


def _pe_add_flat_kernel(x_ref, pe_ref, o_ref):
    # x_ref/pe_ref/o_ref: (ts, batch*hidden) tiles; pe pre-tiled at init.
    o_ref[...] = x_ref[...] + pe_ref[...].astype(x_ref.dtype)


# ----------------------------------------------------------------------------
# Tile sizing
# ----------------------------------------------------------------------------
def _pick_seq_tile(seq_len: int, vmem_row_bytes: int, itemsize: int,
                   target_bytes: int = 2 << 20) -> int:
    """Sequence rows per tile.

    ~2 MiB per x/out VMEM buffer (amortizes the ~0.35 us per-grid-step overhead
    while staying inside v5e's 16 MiB scoped-VMEM default with double
    buffering), rounded to the sublane packing, and capped so there are at
    least 2 grid steps whenever seq_len allows (v7x has 2 TensorCores and the
    "parallel" grid axis is what gets sharded across them).
    """
    mult = max(8, 32 // max(itemsize, 1))    # 8 rows (f32), 16 (bf16), 32 (int8/fp8)
    if seq_len <= mult:
        return seq_len                        # can't split below one sublane group
    ts = max(1, target_bytes // max(vmem_row_bytes, 1))
    ts = min(ts, pl.cdiv(seq_len, 2))         # guarantee >= 2 tiles
    ts = max(mult, (ts // mult) * mult)       # sublane-aligned
    return min(ts, seq_len)


# ----------------------------------------------------------------------------
# Forward
# ----------------------------------------------------------------------------
def positional_encoding(x: jnp.ndarray, pe_table: jnp.ndarray) -> jnp.ndarray:
    """x: (seq_len, batch, hidden); pe_table from init_pe_table (same dtype as x
    ideally — if not, the cast happens per-tile in-kernel, never as a
    standalone full-buffer convert)."""
    seq_len, batch, hidden = x.shape
    max_len, pe_cols = pe_table.shape
    assert seq_len <= max_len, "seq_len exceeds max_len (same assumption as the PyTorch module)"

    itemsize = jnp.dtype(x.dtype).itemsize
    pe_itemsize = jnp.dtype(pe_table.dtype).itemsize
    mult = max(8, 32 // max(itemsize, 1))

    if pe_cols == hidden:
        # ---- main path: in-kernel batch broadcast (lane axis = hidden) ----
        # VMEM footprint per seq row uses padded sublane/lane sizes so small
        # batch (< 8 sublanes) doesn't silently inflate past the budget.
        vmem_row_bytes = _round_up(batch, mult) * _round_up(hidden, _LANE) * itemsize
        ts = _pick_seq_tile(seq_len, vmem_row_bytes, itemsize)

        pe_in = pe_table
        if ts == seq_len and (seq_len % mult != 0):
            # Tiny single-tile, non-sublane-aligned seq: slice so the pe block's
            # second-minor dim equals the full array dim (legal block shape).
            pe_in = pe_table[:seq_len]

        n_tiles = pl.cdiv(seq_len, ts)
        cost = pl.CostEstimate(
            flops=seq_len * batch * hidden,
            transcendentals=0,
            bytes_accessed=(2 * seq_len * batch * hidden * itemsize
                            + seq_len * hidden * pe_itemsize),
        )
        return pl.pallas_call(
            _pe_add_bcast_kernel,
            out_shape=jax.ShapeDtypeStruct((seq_len, batch, hidden), x.dtype),
            grid_spec=pltpu.PrefetchScalarGridSpec(
                num_scalar_prefetch=0,
                grid=(n_tiles,),
                in_specs=[
                    # x tiles: (ts, B, H); last two dims equal full dims -> legal.
                    pl.BlockSpec((ts, batch, hidden), lambda i: (i, 0, 0)),
                    # pe rows read straight from the (max_len, H) buffer.
                    pl.BlockSpec((ts, hidden), lambda i: (i, 0)),
                ],
                out_specs=pl.BlockSpec((ts, batch, hidden), lambda i: (i, 0, 0)),
            ),
            compiler_params=pltpu.CompilerParams(
                dimension_semantics=("parallel",),
            ),
            cost_estimate=cost,
            input_output_aliases={0: 0},     # reuse x's HBM buffer for the output
        )(x, pe_in)

    # ---- fallback path (hidden < 128): flat lane-dense 2-D add ----
    bh = batch * hidden
    if pe_cols != bh:
        raise ValueError(
            f"pe_table last dim {pe_cols} must be hidden ({hidden}) or "
            f"batch*hidden ({bh})")

    x2 = x.reshape(seq_len, bh)              # free bitcast under jit
    vmem_row_bytes = _round_up(bh, _LANE) * itemsize
    ts = _pick_seq_tile(seq_len, vmem_row_bytes, itemsize)

    pe_in = pe_table
    if ts == seq_len and (seq_len % mult != 0):
        pe_in = pe_table[:seq_len]

    n_tiles = pl.cdiv(seq_len, ts)
    cost = pl.CostEstimate(
        flops=seq_len * bh,
        transcendentals=0,
        bytes_accessed=2 * seq_len * bh * itemsize + seq_len * bh * pe_itemsize,
    )
    out2 = pl.pallas_call(
        _pe_add_flat_kernel,
        out_shape=jax.ShapeDtypeStruct((seq_len, bh), x.dtype),
        grid_spec=pltpu.PrefetchScalarGridSpec(
            num_scalar_prefetch=0,
            grid=(n_tiles,),
            in_specs=[
                pl.BlockSpec((ts, bh), lambda i: (i, 0)),   # x tiles
                pl.BlockSpec((ts, bh), lambda i: (i, 0)),   # pe rows from max_len buffer
            ],
            out_specs=pl.BlockSpec((ts, bh), lambda i: (i, 0)),
        ),
        compiler_params=pltpu.CompilerParams(
            dimension_semantics=("parallel",),
        ),
        cost_estimate=cost,
        input_output_aliases={0: 0},
    )(x2, pe_in)
    return out2.reshape(seq_len, batch, hidden)


if __name__ == "__main__":
    key = jax.random.PRNGKey(0)
    k1, k2 = jax.random.split(key)

    # --- Case 1: small hidden (<128) -> flat fallback path (pre-tiled pe) ---
    S1, B1, H1, L1 = 8, 2, 32, 64
    x1 = jax.random.normal(k1, (S1, B1, H1), dtype=jnp.float32)
    pe1 = init_pe_table(H1, max_len=L1, dtype=x1.dtype, batch=B1)
    out1 = jax.block_until_ready(jax.jit(positional_encoding)(x1, pe1))
    ref1 = x1 + _sinusoid_table(H1, L1)[:S1][:, None, :]
    assert out1.shape == x1.shape
    assert jnp.allclose(out1, ref1, atol=1e-6), "mismatch vs reference (flat path)"

    # --- Case 2: lane-dense hidden (>=128), in-kernel batch broadcast,
    #             seq_len not divisible by the tile -> exercises partial tile.
    S2, B2, H2, L2 = 20, 2, 128, 64
    x2 = jax.random.normal(k2, (S2, B2, H2), dtype=jnp.float32)
    pe2 = init_pe_table(H2, max_len=L2, dtype=x2.dtype)
    out2 = jax.block_until_ready(jax.jit(positional_encoding)(x2, pe2))
    ref2 = x2 + _sinusoid_table(H2, L2)[:S2][:, None, :]
    assert out2.shape == x2.shape
    assert jnp.allclose(out2, ref2, atol=1e-6), "mismatch vs reference (broadcast path)"

    print("KERNEL_OK")
</pallas_src>

<mosaic_0001>
module attributes {stable_mosaic.version = 11 : i64} {
  func.func @_pe_add_flat_kernel(%arg0: i32, %arg1: memref<8x64xf32, #tpu.memory_space<vmem>>, %arg2: memref<8x64xf32, #tpu.memory_space<vmem>>, %arg3: memref<8x64xf32, #tpu.memory_space<vmem>>) attributes {dimension_semantics = [#tpu.dimension_semantics<parallel>], iteration_bounds = array<i64: 1>, scalar_prefetch = 0 : i64, scratch_operands = 0 : i64, tpu.core_type = #tpu.core_type<tc>, window_params = [{transform_indices = @transform_0, window_bounds = array<i64: 8, 64>}, {transform_indices = @transform_1, window_bounds = array<i64: 8, 64>}, {transform_indices = @transform_2, window_bounds = array<i64: 8, 64>}]} {
    %c0 = arith.constant 0 : index
    %c0_0 = arith.constant 0 : index
    %0 = vector.load %arg1[%c0, %c0_0] : memref<8x64xf32, #tpu.memory_space<vmem>>, vector<8x64xf32>
    %c0_1 = arith.constant 0 : index
    %c0_2 = arith.constant 0 : index
    %1 = vector.load %arg2[%c0_1, %c0_2] : memref<8x64xf32, #tpu.memory_space<vmem>>, vector<8x64xf32>
    %2 = arith.addf %0, %1 : vector<8x64xf32>
    %c0_3 = arith.constant 0 : index
    %c0_4 = arith.constant 0 : index
    %3 = vector.load %arg3[%c0_3, %c0_4] : memref<8x64xf32, #tpu.memory_space<vmem>>, vector<8x64xf32>
    tpu.vector_store %arg3[%c0_3, %c0_4], %2 {strides = array<i32>} : memref<8x64xf32, #tpu.memory_space<vmem>>, vector<8x64xf32>,
    return
  }
  func.func @transform_0(%arg0: i32) -> (i32, i32) {
    %c0_i32 = arith.constant 0 : i32
    %c0_i32_0 = arith.constant 0 : i32
    return %arg0, %c0_i32 : i32, i32
  }
  func.func @transform_1(%arg0: i32) -> (i32, i32) {
    %c0_i32 = arith.constant 0 : i32
    %c0_i32_0 = arith.constant 0 : i32
    return %arg0, %c0_i32 : i32, i32
  }
  func.func @transform_2(%arg0: i32) -> (i32, i32) {
    %c0_i32 = arith.constant 0 : i32
    %c0_i32_0 = arith.constant 0 : i32
    return %arg0, %c0_i32 : i32, i32
  }
}

</mosaic_0001>

<llo_original>
// kernel: positional_encoding.1
$region0: #{positional_encoding.1}
  #allocation0 [shape = 'u32[]', space=smem, size = 0x4, offset = 0x4, fixed_abs, tag = 'smem constant byte address 0x4 - core index']
  #allocation1 [shape = 'u32[144,128]{1,0:T(1,128)}', space=vmem, size = 0x12000, scoped, tag = 'internal scratch']
  %s0 = inlined_call_operand.vmem [shape: f32[8,64], index: 0, kind: input, shape index: {}, may-alias: {0,2}]
  %s1 = inlined_call_operand.hbm [shape: f32[64,64], index: 1, kind: input, shape index: {}]
  %s2 = inlined_call_operand.vmem [shape: f32[8,64], index: 2, kind: output, shape index: {}, may-alias: {0,2}]
  %s3 = sld [smem:[#allocation0]]
  $region22: #{positional_encoding.1} parent=0
    _
  %s5 = ssub.s32 1, %s3
  %s6 = scalar_select 0, %s5, %s3
  $region1: #{positional_encoding.1} parent=0
    #allocation2 [shape = 'u8[4096]{0}', space=vmem, size = 0x1000, scoped, tag = 'input window, operand 1, single buffered']
    #allocation3 [shape = 's32[1]{0}', space=sflag, size = 0x4, scoped, tag = 'scoped memory for positional_encoding.1']
    %7 = vsyncpa [#allocation3], 0
    // Predicated region
    $region2: #{positional_encoding.1} parent=1 // pred_check
      _
    $region3: #{positional_encoding.1} parent=1 // pred_check_branch
      %9 = sbr.rel (0) target = $region5
    $region4: #{positional_encoding.1} parent=1 // pred_region
      _
    $region5: #{positional_encoding.1} parent=1 // pred_fallthru
      _
    // Predicated region
    $region6: #{positional_encoding.1} parent=1 // pred_check
      _
    $region7: #{positional_encoding.1} parent=1 // pred_check_branch
      %11 = sbr.rel (0) target = $region9
    $region8: #{positional_encoding.1} parent=1 // pred_region
      %s13 = ssub.s32 128, 128
      %14 = vsyncadd [#allocation3], %s13
      %s16 = sshll.u32 [#allocation2], 4
      %s17 = int_to_ptr.vmem [resolvable:$true] %s16
      %19 = dma.hbm_to_vmem [thread:$0]  %s1, 128, %s17, [#allocation3]
    $region9: #{positional_encoding.1} parent=1 // pred_fallthru
      _
    // Predicated region
    $region10: #{positional_encoding.1} parent=1 // pred_check
      _
    $region11: #{positional_encoding.1} parent=1 // pred_check_branch
      %21 = sbr.rel (0) target = $region13
    $region12: #{positional_encoding.1} parent=1 // pred_region
      %22 = dma.done [#allocation3], 128
    $region13: #{positional_encoding.1} parent=1 // pred_fallthru
      _
    %v23 = vld [vmem:[%s0] sm:$0xff]
    %v24 = vld [vmem:[#allocation2] sm:$0xff]
    %v25 = vadd.f32 %v23, %v24
    %vm26 = vcmask 523264
    %27 = vst.msk [vmem:[%s2] sm:$0xff] %vm26, %v25
    // Predicated region
    $region14: #{positional_encoding.1} parent=1 // pred_check
      _
    $region15: #{positional_encoding.1} parent=1 // pred_check_branch
      %29 = sbr.rel (0) target = $region17
    $region16: #{positional_encoding.1} parent=1 // pred_region
      _
    $region17: #{positional_encoding.1} parent=1 // pred_fallthru
      _
    // Predicated region
    $region18: #{positional_encoding.1} parent=1 // pred_check
      _
    $region19: #{positional_encoding.1} parent=1 // pred_check_branch
      %31 = sbr.rel (0) target = $region21
    $region20: #{positional_encoding.1} parent=1 // pred_region
      _
    $region21: #{positional_encoding.1} parent=1 // pred_fallthru
      _
    %32 = vsyncpa [#allocation3], 1

</llo_original>
